<compile_context>
chip_gen: v6e
topology: v6e:2x2x1
jax: 0.10.0
libtpu: 0.0.40
codegen_flags: <defaults>
</compile_context>

<pallas_src>
import functools

import jax
import jax.numpy as jnp
from jax import lax
from jax.experimental import pallas as pl
from jax.experimental.pallas import tpu as pltpu


def resblock_kernel(x_ref, w1_ref, b1_ref, w2_ref, b2_ref, o_ref,
                    xext_ref, patch_ref, *, W, halo, compute_dtype):
    # x_ref    : (1, C, P)       one image, channels on sublanes, pixels on lanes
    # w1_ref   : (C, 9*C)        conv1 weights, 3x3 taps folded into K (compute dtype)
    # b1_ref   : (C, 1)          f32
    # w2_ref   : (C, 9*C)        conv2 weights
    # b2_ref   : (C, 1)          f32
    # o_ref    : (1, C, P)       lane-dense output block
    # xext_ref : (C, P + 2*halo) f32 scratch; image at lane offset `halo`, zero
    #                            halos absorb top/bottom row overflow of taps
    # patch_ref: (9*C, P)        f32 scratch holding the folded im2col operand
    C = x_ref.shape[1]
    P = x_ref.shape[2]

    # Column-border masks (only dx != 0 taps need masking; dy overflow lands in
    # the zero halo).
    col = lax.broadcasted_iota(jnp.int32, (1, P), 1) % W
    mask_l = col >= 1          # reading column c-1 is valid
    mask_r = col <= W - 2      # reading column c+1 is valid

    # Clear only the halos (cheap and megacore-safe); the interior is fully
    # overwritten below, so no full-scratch zeroing per step.
    halo_zeros = jnp.zeros((C, halo), dtype=xext_ref.dtype)
    xext_ref[:, :halo] = halo_zeros
    xext_ref[:, halo + P:] = halo_zeros

    taps = [(dy, dx) for dy in (-1, 0, 1) for dx in (-1, 0, 1)]

    def conv3x3_relu(w_ref, b_ref):
        # Build the (9C, P) im2col operand from 9 shifted views of xext, then
        # run a single lane-dense MXU contraction with K = 9*C.
        for k, (dy, dx) in enumerate(taps):
            s0 = halo + dy * W + dx
            t = xext_ref[:, s0:s0 + P]
            if dx == -1:
                t = jnp.where(mask_l, t, 0.0)
            elif dx == 1:
                t = jnp.where(mask_r, t, 0.0)
            patch_ref[k * C:(k + 1) * C, :] = t
        acc = jnp.dot(w_ref[...], patch_ref[...].astype(compute_dtype),
                      preferred_element_type=jnp.float32)        # (C, P) f32
        return jnp.maximum(acc + b_ref[...], 0.0)

    x = x_ref[0]                               # (C, P), aligned residual source
    xext_ref[:, halo:halo + P] = x
    h = conv3x3_relu(w1_ref, b1_ref)

    xext_ref[:, halo:halo + P] = h
    y = conv3x3_relu(w2_ref, b2_ref)

    o_ref[0] = (x + y).astype(o_ref.dtype)     # lane-dense (C, P) store


def resblock_pallas(x_nchw, w1_oihw, b1, w2_oihw, b2, *, use_bf16=True):
    """ResBlock forward. x: (N,C,H,W) f32; weights OIHW (PyTorch layout); biases (C,)."""
    N, Cin, H, W = x_nchw.shape
    Ch = w1_oihw.shape[0]
    assert Cin == Ch, "ResBlock residual add requires in_ch == hid_ch"
    assert w1_oihw.shape == (Ch, Cin, 3, 3) and w2_oihw.shape == (Ch, Ch, 3, 3)

    P = H * W
    compute_dtype = jnp.bfloat16 if use_bf16 else jnp.float32

    # Free reshape: NCHW is contiguous with W fastest -> (N, C, H*W) pixel-flat.
    x = x_nchw.reshape(N, Cin, P)

    # Fold the 3x3 taps into the contraction: (O,I,3,3) -> (O, 9*I), with
    # K index = (ky*3 + kx)*I + i matching the kernel's patch stacking order.
    def fold(w):
        o, i = w.shape[0], w.shape[1]
        return jnp.transpose(w, (0, 2, 3, 1)).reshape(o, 9 * i).astype(compute_dtype)

    w1m, w2m = fold(w1_oihw), fold(w2_oihw)
    b1c = b1.reshape(Ch, 1).astype(jnp.float32)
    b2c = b2.reshape(Ch, 1).astype(jnp.float32)

    # Lane halo must cover the largest tap shift (W+1); keep it 128-aligned so
    # the interior store and the halo clears are lane-aligned.
    halo = max(128, pl.cdiv(W + 1, 128) * 128)

    kernel = functools.partial(resblock_kernel, W=W, halo=halo,
                               compute_dtype=compute_dtype)

    out = pl.pallas_call(
        kernel,
        out_shape=jax.ShapeDtypeStruct((N, Ch, P), x_nchw.dtype),
        grid_spec=pltpu.PrefetchScalarGridSpec(
            num_scalar_prefetch=0,
            grid=(N,),
            in_specs=[
                pl.BlockSpec((1, Cin, P), lambda n: (n, 0, 0)),
                pl.BlockSpec((Ch, 9 * Cin), lambda n: (0, 0)),
                pl.BlockSpec((Ch, 1), lambda n: (0, 0)),
                pl.BlockSpec((Ch, 9 * Ch), lambda n: (0, 0)),
                pl.BlockSpec((Ch, 1), lambda n: (0, 0)),
            ],
            out_specs=pl.BlockSpec((1, Ch, P), lambda n: (n, 0, 0)),
            scratch_shapes=[
                pltpu.VMEM((Cin, P + 2 * halo), jnp.float32),   # row-extended image/hidden
                pltpu.VMEM((9 * Cin, P), jnp.float32),          # folded im2col operand
            ],
        ),
        compiler_params=pltpu.CompilerParams(
            dimension_semantics=("parallel",)),
    )(x, w1m, b1c, w2m, b2c)

    return out.reshape(N, Ch, H, W)


def resblock_reference(x, w1, b1, w2, b2):
    """Plain-JAX f32 reference in NCHW/OIHW (matches the PyTorch module)."""
    dn = lax.conv_dimension_numbers(x.shape, w1.shape, ("NCHW", "OIHW", "NCHW"))
    h = lax.conv_general_dilated(x, w1, (1, 1), "SAME", dimension_numbers=dn)
    h = jnp.maximum(h + b1[None, :, None, None], 0.0)
    y = lax.conv_general_dilated(h, w2, (1, 1), "SAME", dimension_numbers=dn)
    y = jnp.maximum(y + b2[None, :, None, None], 0.0)
    return x + y


if __name__ == "__main__":
    N, C, H, W = 2, 4, 16, 16              # in_ch == hid_ch == 4
    key = jax.random.PRNGKey(0)
    kx, k1, kb1, k2, kb2 = jax.random.split(key, 5)

    x = jax.random.normal(kx, (N, C, H, W), dtype=jnp.float32)
    # PyTorch Conv2d weights are OIHW; deterministic synthetic params.
    w1 = jax.random.normal(k1, (C, C, 3, 3), dtype=jnp.float32) * 0.1
    b1 = jax.random.normal(kb1, (C,), dtype=jnp.float32) * 0.1
    w2 = jax.random.normal(k2, (C, C, 3, 3), dtype=jnp.float32) * 0.1
    b2 = jax.random.normal(kb2, (C,), dtype=jnp.float32) * 0.1

    out = jax.block_until_ready(resblock_pallas(x, w1, b1, w2, b2))
    ref = jax.block_until_ready(resblock_reference(x, w1, b1, w2, b2))

    assert out.shape == (N, C, H, W)
    # bf16 MXU operands with f32 accumulation vs. f32 reference -> loose tolerance.
    max_err = float(jnp.max(jnp.abs(out - ref)))
    assert jnp.allclose(out, ref, rtol=3e-2, atol=3e-2), f"max abs err {max_err}"
    print("KERNEL_OK")
</pallas_src>

<mosaic_0001>
module attributes {stable_mosaic.version = 11 : i64} {
  func.func @resblock_kernel(%arg0: i32, %arg1: memref<1x4x256xf32, #tpu.memory_space<vmem>>, %arg2: memref<4x36xbf16, #tpu.memory_space<vmem>>, %arg3: memref<4x1xf32, #tpu.memory_space<vmem>>, %arg4: memref<4x36xbf16, #tpu.memory_space<vmem>>, %arg5: memref<4x1xf32, #tpu.memory_space<vmem>>, %arg6: memref<1x4x256xf32, #tpu.memory_space<vmem>>, %arg7: memref<4x512xf32, #tpu.memory_space<vmem>>, %arg8: memref<36x256xf32, #tpu.memory_space<vmem>>) attributes {dimension_semantics = [#tpu.dimension_semantics<parallel>], iteration_bounds = array<i64: 2>, scalar_prefetch = 0 : i64, scratch_operands = 2 : i64, tpu.core_type = #tpu.core_type<tc>, window_params = [{transform_indices = @transform_0, window_bounds = array<i64: 1, 4, 256>}, {pipeline_mode = #tpu.pipeline_mode<synchronous>, transform_indices = @transform_1, window_bounds = array<i64: 4, 36>}, {pipeline_mode = #tpu.pipeline_mode<synchronous>, transform_indices = @transform_2, window_bounds = array<i64: 4, 1>}, {pipeline_mode = #tpu.pipeline_mode<synchronous>, transform_indices = @transform_3, window_bounds = array<i64: 4, 36>}, {pipeline_mode = #tpu.pipeline_mode<synchronous>, transform_indices = @transform_4, window_bounds = array<i64: 4, 1>}, {transform_indices = @transform_5, window_bounds = array<i64: 1, 4, 256>}]} {
    %0 = tpu.iota {dimensions = array<i32: 1>} : vector<1x256xi32>
    %c16_i32 = arith.constant 16 : i32
    %c0_i32 = arith.constant 0 : i32
    %1 = arith.cmpi eq, %c16_i32, %c0_i32 : i32
    %c1_i32 = arith.constant 1 : i32
    %2 = arith.select %1, %c1_i32, %c16_i32 : i32
    %3 = vector.broadcast %2 : i32 to vector<1x256xi32>
    %4 = arith.remsi %0, %3 : vector<1x256xi32>
    %c0_i32_0 = arith.constant 0 : i32
    %5 = vector.broadcast %c0_i32_0 : i32 to vector<1x256xi32>
    %6 = arith.cmpi ne, %4, %5 : vector<1x256xi32>
    %c0_i32_1 = arith.constant 0 : i32
    %7 = vector.broadcast %c0_i32_1 : i32 to vector<1x256xi32>
    %8 = arith.cmpi slt, %4, %7 : vector<1x256xi32>
    %c0_i32_2 = arith.constant 0 : i32
    %9 = arith.cmpi slt, %2, %c0_i32_2 : i32
    %10 = vector.broadcast %9 : i1 to vector<1x256xi1>
    %11 = vector.broadcast %10 : vector<1x256xi1> to vector<1x256xi1>
    %12 = arith.xori %8, %11 : vector<1x256xi1>
    %13 = arith.andi %12, %6 : vector<1x256xi1>
    %14 = vector.broadcast %2 : i32 to vector<1x256xi32>
    %15 = arith.addi %4, %14 : vector<1x256xi32>
    %16 = arith.select %13, %15, %4 : vector<1x256xi1>, vector<1x256xi32>
    %c1_i32_3 = arith.constant 1 : i32
    %17 = vector.broadcast %c1_i32_3 : i32 to vector<1x256xi32>
    %18 = arith.cmpi sge, %16, %17 : vector<1x256xi32>
    %c14_i32 = arith.constant 14 : i32
    %19 = vector.broadcast %c14_i32 : i32 to vector<1x256xi32>
    %20 = arith.cmpi sle, %16, %19 : vector<1x256xi32>
    %cst = arith.constant 0.000000e+00 : f32
    %21 = vector.broadcast %cst : f32 to vector<4x128xf32>
    %c0 = arith.constant 0 : index
    %c0_4 = arith.constant 0 : index
    %22 = vector.load %arg7[%c0, %c0_4] : memref<4x512xf32, #tpu.memory_space<vmem>>, vector<4x128xf32>
    tpu.vector_store %arg7[%c0, %c0_4], %21 {strides = array<i32>} : memref<4x512xf32, #tpu.memory_space<vmem>>, vector<4x128xf32>,
    %c0_5 = arith.constant 0 : index
    %c384 = arith.constant 384 : index
    %23 = vector.load %arg7[%c0_5, %c384] : memref<4x512xf32, #tpu.memory_space<vmem>>, vector<4x128xf32>
    tpu.vector_store %arg7[%c0_5, %c384], %21 {strides = array<i32>} : memref<4x512xf32, #tpu.memory_space<vmem>>, vector<4x128xf32>,
    %c0_6 = arith.constant 0 : index
    %c0_7 = arith.constant 0 : index
    %c0_8 = arith.constant 0 : index
    %24 = vector.load %arg1[%c0_6, %c0_7, %c0_8] : memref<1x4x256xf32, #tpu.memory_space<vmem>>, vector<1x4x256xf32>
    %25 = vector.shape_cast %24 : vector<1x4x256xf32> to vector<4x256xf32>
    %c0_9 = arith.constant 0 : index
    %c128 = arith.constant 128 : index
    %26 = vector.load %arg7[%c0_9, %c128] : memref<4x512xf32, #tpu.memory_space<vmem>>, vector<4x256xf32>
    tpu.vector_store %arg7[%c0_9, %c128], %25 {strides = array<i32>} : memref<4x512xf32, #tpu.memory_space<vmem>>, vector<4x256xf32>,
    %c0_10 = arith.constant 0 : index
    %c111 = arith.constant 111 : index
    %27 = vector.load %arg7[%c0_10, %c111] : memref<4x512xf32, #tpu.memory_space<vmem>>, vector<4x256xf32>
    %cst_11 = arith.constant 0.000000e+00 : f32
    %28 = vector.shape_cast %18 : vector<1x256xi1> to vector<1x256xi1>
    %29 = vector.broadcast %28 : vector<1x256xi1> to vector<4x256xi1>
    %30 = vector.broadcast %cst_11 : f32 to vector<4x256xf32>
    %31 = arith.select %29, %27, %30 : vector<4x256xi1>, vector<4x256xf32>
    %c0_12 = arith.constant 0 : index
    %c0_13 = arith.constant 0 : index
    %32 = vector.load %arg8[%c0_12, %c0_13] : memref<36x256xf32, #tpu.memory_space<vmem>>, vector<4x256xf32>
    tpu.vector_store %arg8[%c0_12, %c0_13], %31 {strides = array<i32>} : memref<36x256xf32, #tpu.memory_space<vmem>>, vector<4x256xf32>,
    %c0_14 = arith.constant 0 : index
    %c112 = arith.constant 112 : index
    %33 = vector.load %arg7[%c0_14, %c112] : memref<4x512xf32, #tpu.memory_space<vmem>>, vector<4x256xf32>
    %c4 = arith.constant 4 : index
    %c0_15 = arith.constant 0 : index
    %34 = vector.load %arg8[%c4, %c0_15] : memref<36x256xf32, #tpu.memory_space<vmem>>, vector<4x256xf32>
    tpu.vector_store %arg8[%c4, %c0_15], %33 {strides = array<i32>} : memref<36x256xf32, #tpu.memory_space<vmem>>, vector<4x256xf32>,
    %c0_16 = arith.constant 0 : index
    %c113 = arith.constant 113 : index
    %35 = vector.load %arg7[%c0_16, %c113] : memref<4x512xf32, #tpu.memory_space<vmem>>, vector<4x256xf32>
    %cst_17 = arith.constant 0.000000e+00 : f32
    %36 = vector.shape_cast %20 : vector<1x256xi1> to vector<1x256xi1>
    %37 = vector.broadcast %36 : vector<1x256xi1> to vector<4x256xi1>
    %38 = vector.broadcast %cst_17 : f32 to vector<4x256xf32>
    %39 = arith.select %37, %35, %38 : vector<4x256xi1>, vector<4x256xf32>
    %c8 = arith.constant 8 : index
    %c0_18 = arith.constant 0 : index
    %40 = vector.load %arg8[%c8, %c0_18] : memref<36x256xf32, #tpu.memory_space<vmem>>, vector<4x256xf32>
    tpu.vector_store %arg8[%c8, %c0_18], %39 {strides = array<i32>} : memref<36x256xf32, #tpu.memory_space<vmem>>, vector<4x256xf32>,
    %c0_19 = arith.constant 0 : index
    %c127 = arith.constant 127 : index
    %41 = vector.load %arg7[%c0_19, %c127] : memref<4x512xf32, #tpu.memory_space<vmem>>, vector<4x256xf32>
    %cst_20 = arith.constant 0.000000e+00 : f32
    %42 = vector.shape_cast %18 : vector<1x256xi1> to vector<1x256xi1>
    %43 = vector.broadcast %42 : vector<1x256xi1> to vector<4x256xi1>
    %44 = vector.broadcast %cst_20 : f32 to vector<4x256xf32>
    %45 = arith.select %43, %41, %44 : vector<4x256xi1>, vector<4x256xf32>
    %c12 = arith.constant 12 : index
    %c0_21 = arith.constant 0 : index
    %46 = vector.load %arg8[%c12, %c0_21] : memref<36x256xf32, #tpu.memory_space<vmem>>, vector<4x256xf32>
    tpu.vector_store %arg8[%c12, %c0_21], %45 {strides = array<i32>} : memref<36x256xf32, #tpu.memory_space<vmem>>, vector<4x256xf32>,
    %c0_22 = arith.constant 0 : index
    %c128_23 = arith.constant 128 : index
    %47 = vector.load %arg7[%c0_22, %c128_23] : memref<4x512xf32, #tpu.memory_space<vmem>>, vector<4x256xf32>
    %c16 = arith.constant 16 : index
    %c0_24 = arith.constant 0 : index
    %48 = vector.load %arg8[%c16, %c0_24] : memref<36x256xf32, #tpu.memory_space<vmem>>, vector<4x256xf32>
    tpu.vector_store %arg8[%c16, %c0_24], %47 {strides = array<i32>} : memref<36x256xf32, #tpu.memory_space<vmem>>, vector<4x256xf32>,
    %c0_25 = arith.constant 0 : index
    %c129 = arith.constant 129 : index
    %49 = vector.load %arg7[%c0_25, %c129] : memref<4x512xf32, #tpu.memory_space<vmem>>, vector<4x256xf32>
    %cst_26 = arith.constant 0.000000e+00 : f32
    %50 = vector.shape_cast %20 : vector<1x256xi1> to vector<1x256xi1>
    %51 = vector.broadcast %50 : vector<1x256xi1> to vector<4x256xi1>
    %52 = vector.broadcast %cst_26 : f32 to vector<4x256xf32>
    %53 = arith.select %51, %49, %52 : vector<4x256xi1>, vector<4x256xf32>
    %c20 = arith.constant 20 : index
    %c0_27 = arith.constant 0 : index
    %54 = vector.load %arg8[%c20, %c0_27] : memref<36x256xf32, #tpu.memory_space<vmem>>, vector<4x256xf32>
    tpu.vector_store %arg8[%c20, %c0_27], %53 {strides = array<i32>} : memref<36x256xf32, #tpu.memory_space<vmem>>, vector<4x256xf32>,
    %c0_28 = arith.constant 0 : index
    %c143 = arith.constant 143 : index
    %55 = vector.load %arg7[%c0_28, %c143] : memref<4x512xf32, #tpu.memory_space<vmem>>, vector<4x256xf32>
    %cst_29 = arith.constant 0.000000e+00 : f32
    %56 = vector.shape_cast %18 : vector<1x256xi1> to vector<1x256xi1>
    %57 = vector.broadcast %56 : vector<1x256xi1> to vector<4x256xi1>
    %58 = vector.broadcast %cst_29 : f32 to vector<4x256xf32>
    %59 = arith.select %57, %55, %58 : vector<4x256xi1>, vector<4x256xf32>
    %c24 = arith.constant 24 : index
    %c0_30 = arith.constant 0 : index
    %60 = vector.load %arg8[%c24, %c0_30] : memref<36x256xf32, #tpu.memory_space<vmem>>, vector<4x256xf32>
    tpu.vector_store %arg8[%c24, %c0_30], %59 {strides = array<i32>} : memref<36x256xf32, #tpu.memory_space<vmem>>, vector<4x256xf32>,
    %c0_31 = arith.constant 0 : index
    %c144 = arith.constant 144 : index
    %61 = vector.load %arg7[%c0_31, %c144] : memref<4x512xf32, #tpu.memory_space<vmem>>, vector<4x256xf32>
    %c28 = arith.constant 28 : index
    %c0_32 = arith.constant 0 : index
    %62 = vector.load %arg8[%c28, %c0_32] : memref<36x256xf32, #tpu.memory_space<vmem>>, vector<4x256xf32>
    tpu.vector_store %arg8[%c28, %c0_32], %61 {strides = array<i32>} : memref<36x256xf32, #tpu.memory_space<vmem>>, vector<4x256xf32>,
    %c0_33 = arith.constant 0 : index
    %c145 = arith.constant 145 : index
    %63 = vector.load %arg7[%c0_33, %c145] : memref<4x512xf32, #tpu.memory_space<vmem>>, vector<4x256xf32>
    %cst_34 = arith.constant 0.000000e+00 : f32
    %64 = vector.shape_cast %20 : vector<1x256xi1> to vector<1x256xi1>
    %65 = vector.broadcast %64 : vector<1x256xi1> to vector<4x256xi1>
    %66 = vector.broadcast %cst_34 : f32 to vector<4x256xf32>
    %67 = arith.select %65, %63, %66 : vector<4x256xi1>, vector<4x256xf32>
    %c32 = arith.constant 32 : index
    %c0_35 = arith.constant 0 : index
    %68 = vector.load %arg8[%c32, %c0_35] : memref<36x256xf32, #tpu.memory_space<vmem>>, vector<4x256xf32>
    tpu.vector_store %arg8[%c32, %c0_35], %67 {strides = array<i32>} : memref<36x256xf32, #tpu.memory_space<vmem>>, vector<4x256xf32>,
    %c0_36 = arith.constant 0 : index
    %c0_37 = arith.constant 0 : index
    %69 = vector.load %arg2[%c0_36, %c0_37] : memref<4x36xbf16, #tpu.memory_space<vmem>>, vector<4x36xbf16>
    %c0_38 = arith.constant 0 : index
    %c0_39 = arith.constant 0 : index
    %70 = vector.load %arg8[%c0_38, %c0_39] : memref<36x256xf32, #tpu.memory_space<vmem>>, vector<36x256xf32>
    %71 = arith.truncf %70 : vector<36x256xf32> to vector<36x256xbf16>
    %cst_40 = arith.constant dense<0.000000e+00> : vector<4x256xf32>
    %72 = tpu.matmul %69, %71, %cst_40 {dimension_numbers = #tpu.dot_dimension_numbers<[1], [0], [0], [1], [0, 0, 1, 1], [], []>} : vector<4x36xbf16>, vector<36x256xbf16>, vector<4x256xf32> -> vector<4x256xf32>
    %c0_41 = arith.constant 0 : index
    %c0_42 = arith.constant 0 : index
    %73 = vector.load %arg3[%c0_41, %c0_42] : memref<4x1xf32, #tpu.memory_space<vmem>>, vector<4x1xf32>
    %74 = vector.broadcast %73 : vector<4x1xf32> to vector<4x256xf32>
    %75 = arith.addf %72, %74 : vector<4x256xf32>
    %cst_43 = arith.constant 0.000000e+00 : f32
    %76 = vector.broadcast %cst_43 : f32 to vector<4x256xf32>
    %77 = arith.maximumf %75, %76 : vector<4x256xf32>
    %c0_44 = arith.constant 0 : index
    %c128_45 = arith.constant 128 : index
    %78 = vector.load %arg7[%c0_44, %c128_45] : memref<4x512xf32, #tpu.memory_space<vmem>>, vector<4x256xf32>
    tpu.vector_store %arg7[%c0_44, %c128_45], %77 {strides = array<i32>} : memref<4x512xf32, #tpu.memory_space<vmem>>, vector<4x256xf32>,
    %c0_46 = arith.constant 0 : index
    %c111_47 = arith.constant 111 : index
    %79 = vector.load %arg7[%c0_46, %c111_47] : memref<4x512xf32, #tpu.memory_space<vmem>>, vector<4x256xf32>
    %cst_48 = arith.constant 0.000000e+00 : f32
    %80 = vector.shape_cast %18 : vector<1x256xi1> to vector<1x256xi1>
    %81 = vector.broadcast %80 : vector<1x256xi1> to vector<4x256xi1>
    %82 = vector.broadcast %cst_48 : f32 to vector<4x256xf32>
    %83 = arith.select %81, %79, %82 : vector<4x256xi1>, vector<4x256xf32>
    %c0_49 = arith.constant 0 : index
    %c0_50 = arith.constant 0 : index
    %84 = vector.load %arg8[%c0_49, %c0_50] : memref<36x256xf32, #tpu.memory_space<vmem>>, vector<4x256xf32>
    tpu.vector_store %arg8[%c0_49, %c0_50], %83 {strides = array<i32>} : memref<36x256xf32, #tpu.memory_space<vmem>>, vector<4x256xf32>,
    %c0_51 = arith.constant 0 : index
    %c112_52 = arith.constant 112 : index
    %85 = vector.load %arg7[%c0_51, %c112_52] : memref<4x512xf32, #tpu.memory_space<vmem>>, vector<4x256xf32>
    %c4_53 = arith.constant 4 : index
    %c0_54 = arith.constant 0 : index
    %86 = vector.load %arg8[%c4_53, %c0_54] : memref<36x256xf32, #tpu.memory_space<vmem>>, vector<4x256xf32>
    tpu.vector_store %arg8[%c4_53, %c0_54], %85 {strides = array<i32>} : memref<36x256xf32, #tpu.memory_space<vmem>>, vector<4x256xf32>,
    %c0_55 = arith.constant 0 : index
    %c113_56 = arith.constant 113 : index
    %87 = vector.load %arg7[%c0_55, %c113_56] : memref<4x512xf32, #tpu.memory_space<vmem>>, vector<4x256xf32>
    %cst_57 = arith.constant 0.000000e+00 : f32
    %88 = vector.shape_cast %20 : vector<1x256xi1> to vector<1x256xi1>
    %89 = vector.broadcast %88 : vector<1x256xi1> to vector<4x256xi1>
    %90 = vector.broadcast %cst_57 : f32 to vector<4x256xf32>
    %91 = arith.select %89, %87, %90 : vector<4x256xi1>, vector<4x256xf32>
    %c8_58 = arith.constant 8 : index
    %c0_59 = arith.constant 0 : index
    %92 = vector.load %arg8[%c8_58, %c0_59] : memref<36x256xf32, #tpu.memory_space<vmem>>, vector<4x256xf32>
    tpu.vector_store %arg8[%c8_58, %c0_59], %91 {strides = array<i32>} : memref<36x256xf32, #tpu.memory_space<vmem>>, vector<4x256xf32>,
    %c0_60 = arith.constant 0 : index
    %c127_61 = arith.constant 127 : index
    %93 = vector.load %arg7[%c0_60, %c127_61] : memref<4x512xf32, #tpu.memory_space<vmem>>, vector<4x256xf32>
    %cst_62 = arith.constant 0.000000e+00 : f32
    %94 = vector.shape_cast %18 : vector<1x256xi1> to vector<1x256xi1>
    %95 = vector.broadcast %94 : vector<1x256xi1> to vector<4x256xi1>
    %96 = vector.broadcast %cst_62 : f32 to vector<4x256xf32>
    %97 = arith.select %95, %93, %96 : vector<4x256xi1>, vector<4x256xf32>
    %c12_63 = arith.constant 12 : index
    %c0_64 = arith.constant 0 : index
    %98 = vector.load %arg8[%c12_63, %c0_64] : memref<36x256xf32, #tpu.memory_space<vmem>>, vector<4x256xf32>
    tpu.vector_store %arg8[%c12_63, %c0_64], %97 {strides = array<i32>} : memref<36x256xf32, #tpu.memory_space<vmem>>, vector<4x256xf32>,
    %c0_65 = arith.constant 0 : index
    %c128_66 = arith.constant 128 : index
    %99 = vector.load %arg7[%c0_65, %c128_66] : memref<4x512xf32, #tpu.memory_space<vmem>>, vector<4x256xf32>
    %c16_67 = arith.constant 16 : index
    %c0_68 = arith.constant 0 : index
    %100 = vector.load %arg8[%c16_67, %c0_68] : memref<36x256xf32, #tpu.memory_space<vmem>>, vector<4x256xf32>
    tpu.vector_store %arg8[%c16_67, %c0_68], %99 {strides = array<i32>} : memref<36x256xf32, #tpu.memory_space<vmem>>, vector<4x256xf32>,
    %c0_69 = arith.constant 0 : index
    %c129_70 = arith.constant 129 : index
    %101 = vector.load %arg7[%c0_69, %c129_70] : memref<4x512xf32, #tpu.memory_space<vmem>>, vector<4x256xf32>
    %cst_71 = arith.constant 0.000000e+00 : f32
    %102 = vector.shape_cast %20 : vector<1x256xi1> to vector<1x256xi1>
    %103 = vector.broadcast %102 : vector<1x256xi1> to vector<4x256xi1>
    %104 = vector.broadcast %cst_71 : f32 to vector<4x256xf32>
    %105 = arith.select %103, %101, %104 : vector<4x256xi1>, vector<4x256xf32>
    %c20_72 = arith.constant 20 : index
    %c0_73 = arith.constant 0 : index
    %106 = vector.load %arg8[%c20_72, %c0_73] : memref<36x256xf32, #tpu.memory_space<vmem>>, vector<4x256xf32>
    tpu.vector_store %arg8[%c20_72, %c0_73], %105 {strides = array<i32>} : memref<36x256xf32, #tpu.memory_space<vmem>>, vector<4x256xf32>,
    %c0_74 = arith.constant 0 : index
    %c143_75 = arith.constant 143 : index
    %107 = vector.load %arg7[%c0_74, %c143_75] : memref<4x512xf32, #tpu.memory_space<vmem>>, vector<4x256xf32>
    %cst_76 = arith.constant 0.000000e+00 : f32
    %108 = vector.shape_cast %18 : vector<1x256xi1> to vector<1x256xi1>
    %109 = vector.broadcast %108 : vector<1x256xi1> to vector<4x256xi1>
    %110 = vector.broadcast %cst_76 : f32 to vector<4x256xf32>
    %111 = arith.select %109, %107, %110 : vector<4x256xi1>, vector<4x256xf32>
    %c24_77 = arith.constant 24 : index
    %c0_78 = arith.constant 0 : index
    %112 = vector.load %arg8[%c24_77, %c0_78] : memref<36x256xf32, #tpu.memory_space<vmem>>, vector<4x256xf32>
    tpu.vector_store %arg8[%c24_77, %c0_78], %111 {strides = array<i32>} : memref<36x256xf32, #tpu.memory_space<vmem>>, vector<4x256xf32>,
    %c0_79 = arith.constant 0 : index
    %c144_80 = arith.constant 144 : index
    %113 = vector.load %arg7[%c0_79, %c144_80] : memref<4x512xf32, #tpu.memory_space<vmem>>, vector<4x256xf32>
    %c28_81 = arith.constant 28 : index
    %c0_82 = arith.constant 0 : index
    %114 = vector.load %arg8[%c28_81, %c0_82] : memref<36x256xf32, #tpu.memory_space<vmem>>, vector<4x256xf32>
    tpu.vector_store %arg8[%c28_81, %c0_82], %113 {strides = array<i32>} : memref<36x256xf32, #tpu.memory_space<vmem>>, vector<4x256xf32>,
    %c0_83 = arith.constant 0 : index
    %c145_84 = arith.constant 145 : index
    %115 = vector.load %arg7[%c0_83, %c145_84] : memref<4x512xf32, #tpu.memory_space<vmem>>, vector<4x256xf32>
    %cst_85 = arith.constant 0.000000e+00 : f32
    %116 = vector.shape_cast %20 : vector<1x256xi1> to vector<1x256xi1>
    %117 = vector.broadcast %116 : vector<1x256xi1> to vector<4x256xi1>
    %118 = vector.broadcast %cst_85 : f32 to vector<4x256xf32>
    %119 = arith.select %117, %115, %118 : vector<4x256xi1>, vector<4x256xf32>
    %c32_86 = arith.constant 32 : index
    %c0_87 = arith.constant 0 : index
    %120 = vector.load %arg8[%c32_86, %c0_87] : memref<36x256xf32, #tpu.memory_space<vmem>>, vector<4x256xf32>
    tpu.vector_store %arg8[%c32_86, %c0_87], %119 {strides = array<i32>} : memref<36x256xf32, #tpu.memory_space<vmem>>, vector<4x256xf32>,
    %c0_88 = arith.constant 0 : index
    %c0_89 = arith.constant 0 : index
    %121 = vector.load %arg4[%c0_88, %c0_89] : memref<4x36xbf16, #tpu.memory_space<vmem>>, vector<4x36xbf16>
    %c0_90 = arith.constant 0 : index
    %c0_91 = arith.constant 0 : index
    %122 = vector.load %arg8[%c0_90, %c0_91] : memref<36x256xf32, #tpu.memory_space<vmem>>, vector<36x256xf32>
    %123 = arith.truncf %122 : vector<36x256xf32> to vector<36x256xbf16>
    %cst_92 = arith.constant dense<0.000000e+00> : vector<4x256xf32>
    %124 = tpu.matmul %121, %123, %cst_92 {dimension_numbers = #tpu.dot_dimension_numbers<[1], [0], [0], [1], [0, 0, 1, 1], [], []>} : vector<4x36xbf16>, vector<36x256xbf16>, vector<4x256xf32> -> vector<4x256xf32>
    %c0_93 = arith.constant 0 : index
    %c0_94 = arith.constant 0 : index
    %125 = vector.load %arg5[%c0_93, %c0_94] : memref<4x1xf32, #tpu.memory_space<vmem>>, vector<4x1xf32>
    %126 = vector.broadcast %125 : vector<4x1xf32> to vector<4x256xf32>
    %127 = arith.addf %124, %126 : vector<4x256xf32>
    %cst_95 = arith.constant 0.000000e+00 : f32
    %128 = vector.broadcast %cst_95 : f32 to vector<4x256xf32>
    %129 = arith.maximumf %127, %128 : vector<4x256xf32>
    %130 = arith.addf %25, %129 : vector<4x256xf32>
    %c0_96 = arith.constant 0 : index
    %c0_97 = arith.constant 0 : index
    %c0_98 = arith.constant 0 : index
    %131 = vector.load %arg6[%c0_96, %c0_97, %c0_98] : memref<1x4x256xf32, #tpu.memory_space<vmem>>, vector<1x4x256xf32>
    %132 = vector.shape_cast %131 : vector<1x4x256xf32> to vector<4x256xf32>
    %133 = vector.shape_cast %130 : vector<4x256xf32> to vector<1x4x256xf32>
    tpu.vector_store %arg6[%c0_96, %c0_97, %c0_98], %133 {strides = array<i32>} : memref<1x4x256xf32, #tpu.memory_space<vmem>>, vector<1x4x256xf32>,
    return
  }
  func.func @transform_0(%arg0: i32) -> (i32, i32, i32) {
    %c0_i32 = arith.constant 0 : i32
    %c0_i32_0 = arith.constant 0 : i32
    %c0_i32_1 = arith.constant 0 : i32
    return %arg0, %c0_i32, %c0_i32_0 : i32, i32, i32
  }
  func.func @transform_1(%arg0: i32) -> (i32, i32) {
    %c0_i32 = arith.constant 0 : i32
    %c0_i32_0 = arith.constant 0 : i32
    %c0_i32_1 = arith.constant 0 : i32
    return %c0_i32, %c0_i32_0 : i32, i32
  }
  func.func @transform_2(%arg0: i32) -> (i32, i32) {
    %c0_i32 = arith.constant 0 : i32
    %c0_i32_0 = arith.constant 0 : i32
    %c0_i32_1 = arith.constant 0 : i32
    return %c0_i32, %c0_i32_0 : i32, i32
  }
  func.func @transform_3(%arg0: i32) -> (i32, i32) {
    %c0_i32 = arith.constant 0 : i32
    %c0_i32_0 = arith.constant 0 : i32
    %c0_i32_1 = arith.constant 0 : i32
    return %c0_i32, %c0_i32_0 : i32, i32
  }
  func.func @transform_4(%arg0: i32) -> (i32, i32) {
    %c0_i32 = arith.constant 0 : i32
    %c0_i32_0 = arith.constant 0 : i32
    %c0_i32_1 = arith.constant 0 : i32
    return %c0_i32, %c0_i32_0 : i32, i32
  }
  func.func @transform_5(%arg0: i32) -> (i32, i32, i32) {
    %c0_i32 = arith.constant 0 : i32
    %c0_i32_0 = arith.constant 0 : i32
    %c0_i32_1 = arith.constant 0 : i32
    return %arg0, %c0_i32, %c0_i32_0 : i32, i32, i32
  }
}

</mosaic_0001>

<llo_original>
// kernel: tpu_custom_call.1
$region0: #{tpu_custom_call.1}
  #allocation0 [shape = 'u32[]', space=smem, size = 0x4, offset = 0x4, fixed_abs, tag = 'smem constant byte address 0x4 - core index']
  #allocation1 [shape = 'u32[144,128]{1,0:T(1,128)}', space=vmem, size = 0x12000, scoped, tag = 'internal scratch']
  #allocation2 [shape = 'f32[4,512]{1,0:T(4,128)}', space=vmem, size = 0x2000, scoped, tag = 'scratch operand']
  #allocation3 [shape = 'f32[36,256]{1,0:T(8,128)}', space=vmem, size = 0xa000, scoped, tag = 'scratch operand']
  %s0 = inlined_call_operand.hbm [shape: f32[2,4,256], index: 0, kind: input, shape index: {}]
  %s1 = inlined_call_operand.vmem [shape: bf16[4,36], index: 1, kind: input, shape index: {}]
  %s2 = inlined_call_operand.vmem [shape: f32[4,1], index: 2, kind: input, shape index: {}]
  %s3 = inlined_call_operand.vmem [shape: bf16[4,36], index: 3, kind: input, shape index: {}]
  %s4 = inlined_call_operand.vmem [shape: f32[4,1], index: 4, kind: input, shape index: {}]
  %s5 = inlined_call_operand.hbm [shape: f32[2,4,256], index: 5, kind: output, shape index: {}]
  %s6 = sld [smem:[#allocation0]]
  $region57: #{tpu_custom_call.1} parent=0
    _
  %s8 = ssub.s32 1, %s6
  %s9 = scalar_select 0, %s8, %s6
  $region1: #{tpu_custom_call.1} parent=0
    #allocation4 [shape = 'u8[8192]{0}', space=vmem, size = 0x2000, scoped, tag = 'input window, operand 0']
    #allocation5 [shape = 's32[2]{0}', space=sflag, size = 0x8, scoped, tag = 'scoped memory for tpu_custom_call.1']
    #allocation6 [shape = 's32[2]{0}', space=sflag, size = 0x8, scoped, tag = 'scoped memory for tpu_custom_call.1']
    #allocation7 [shape = 'u8[8192]{0}', space=vmem, size = 0x2000, scoped, tag = 'output window, operand 0']
    %10 = vsyncpa [#allocation5], 0
    %s11 = scalar_lea.sflag [#allocation5], 1
    %12 = vsyncpa %s11, 0
    %13 = vsyncpa [#allocation6], 0
    %s14 = scalar_lea.sflag [#allocation6], 1
    %15 = vsyncpa %s14, 0
    loop: start=0, step=1, limit=4
    $region2: #{tpu_custom_call.1} parent=1 // loop_pre_header
      _
    $region3: #{tpu_custom_call.1} parent=1 // loop_header
      %s17 = sphi 0, %s21
      %p18 = scmp.ge.s32.totalorder %s17, 4
      %s27 = sphi 0, %s29
      %s30 = sphi 0, %s27
      %s31 = sphi 0, %s30
      %s47 = sphi 0, %s31
      %s51 = sphi 0, %s51
      %s53 = sphi 0, %s51
      %s54 = sphi 0, %s53
      %s68 = sphi 0, %s54
      %s72 = sphi 0, %s72
      %s74 = sphi 0, %s72
      %s75 = sphi 0, %s74
      %s89 = sphi 0, %s75
      %s93 = sphi 0, %s93
      %s95 = sphi 0, %s93
      %s96 = sphi 0, %s95
      %s110 = sphi 0, %s96
      %s114 = sphi 0, %s114
      %s116 = sphi 0, %s114
      %s117 = sphi 0, %s116
      %s131 = sphi 0, %s117
      %s137 = sphi 0, %s139
      %s140 = sphi 0, %s137
      %s141 = sphi 0, %s140
      %s157 = sphi 0, %s141
    $region4: #{tpu_custom_call.1} parent=1 // loop_header_branch
      %20 = sbr.rel (%p18) target = $region8
    $region5: #{tpu_custom_call.1} parent=1 // loop_body
      %s22 = ssub.s32 %s17, 1
      %s23 = ssub.s32 %s17, 2
      %s24 = sadd.s32 %s17, 1
      %s25 = ssub.s32 %s17, %s24
      %p26 = scmp.eq.s32.totalorder %s25, 0
      %s28 = sadd.s32 %s27, 1
      %s29 = scalar_select %p26, %s27, %s28
      %p32 = pneg %p26
      %p33 = scmp.eq.s32.totalorder %s17, 1
      %p34 = por %p32, %p33
      %p35 = scmp.ne.s32.totalorder %s27, %s30
      %p36 = scmp.eq.s32.totalorder %s17, 0
      %p37 = por %p35, %p36
      %p38 = scmp.ne.s32.totalorder %s27, %s30
      %p39 = scmp.eq.s32.totalorder %s22, 1
      %p40 = por %p38, %p39
      %p41 = scmp.ne.s32.totalorder %s30, %s31
      %p42 = scmp.eq.s32.totalorder %s22, 0
      %p43 = por %p41, %p42
      %p44 = scmp.ne.s32.totalorder %s30, %s31
      %p45 = scmp.eq.s32.totalorder %s23, 1
      %p46 = por %p44, %p45
      %p48 = scmp.ne.s32.totalorder %s31, %s47
      %p49 = scmp.eq.s32.totalorder %s23, 0
      %p50 = por %p48, %p49
      %s52 = sadd.s32 %s51, 1
      %p55 = scmp.eq.s32.totalorder %s17, 1
      %p56 = scmp.ne.s32.totalorder %s51, %s53
      %p57 = scmp.eq.s32.totalorder %s17, 0
      %p58 = por %p56, %p57
      %p59 = scmp.ne.s32.totalorder %s51, %s53
      %p60 = scmp.eq.s32.totalorder %s22, 1
      %p61 = por %p59, %p60
      %p62 = scmp.ne.s32.totalorder %s53, %s54
      %p63 = scmp.eq.s32.totalorder %s22, 0
      %p64 = por %p62, %p63
      %p65 = scmp.ne.s32.totalorder %s53, %s54
      %p66 = scmp.eq.s32.totalorder %s23, 1
      %p67 = por %p65, %p66
      %p69 = scmp.ne.s32.totalorder %s54, %s68
      %p70 = scmp.eq.s32.totalorder %s23, 0
      %p71 = por %p69, %p70
      %s73 = sadd.s32 %s72, 1
      %p76 = scmp.eq.s32.totalorder %s17, 1
      %p77 = scmp.ne.s32.totalorder %s72, %s74
      %p78 = scmp.eq.s32.totalorder %s17, 0
      %p79 = por %p77, %p78
      %p80 = scmp.ne.s32.totalorder %s72, %s74
      %p81 = scmp.eq.s32.totalorder %s22, 1
      %p82 = por %p80, %p81
      %p83 = scmp.ne.s32.totalorder %s74, %s75
      %p84 = scmp.eq.s32.totalorder %s22, 0
      %p85 = por %p83, %p84
      %p86 = scmp.ne.s32.totalorder %s74, %s75
      %p87 = scmp.eq.s32.totalorder %s23, 1
      %p88 = por %p86, %p87
      %p90 = scmp.ne.s32.totalorder %s75, %s89
      %p91 = scmp.eq.s32.totalorder %s23, 0
      %p92 = por %p90, %p91
      %s94 = sadd.s32 %s93, 1
      %p97 = scmp.eq.s32.totalorder %s17, 1
      %p98 = scmp.ne.s32.totalorder %s93, %s95
      %p99 = scmp.eq.s32.totalorder %s17, 0
      %p100 = por %p98, %p99
      %p101 = scmp.ne.s32.totalorder %s93, %s95
      %p102 = scmp.eq.s32.totalorder %s22, 1
      %p103 = por %p101, %p102
      %p104 = scmp.ne.s32.totalorder %s95, %s96
      %p105 = scmp.eq.s32.totalorder %s22, 0
      %p106 = por %p104, %p105
      %p107 = scmp.ne.s32.totalorder %s95, %s96
      %p108 = scmp.eq.s32.totalorder %s23, 1
      %p109 = por %p107, %p108
      %p111 = scmp.ne.s32.totalorder %s96, %s110
      %p112 = scmp.eq.s32.totalorder %s23, 0
      %p113 = por %p111, %p112
      %s115 = sadd.s32 %s114, 1
      %p118 = scmp.eq.s32.totalorder %s17, 1
      %p119 = scmp.ne.s32.totalorder %s114, %s116
      %p120 = scmp.eq.s32.totalorder %s17, 0
      %p121 = por %p119, %p120
      %p122 = scmp.ne.s32.totalorder %s114, %s116
      %p123 = scmp.eq.s32.totalorder %s22, 1
      %p124 = por %p122, %p123
      %p125 = scmp.ne.s32.totalorder %s116, %s117
      %p126 = scmp.eq.s32.totalorder %s22, 0
      %p127 = por %p125, %p126
      %p128 = scmp.ne.s32.totalorder %s116, %s117
      %p129 = scmp.eq.s32.totalorder %s23, 1
      %p130 = por %p128, %p129
      %p132 = scmp.ne.s32.totalorder %s117, %s131
      %p133 = scmp.eq.s32.totalorder %s23, 0
      %p134 = por %p132, %p133
      %s135 = ssub.s32 %s17, %s24
      %p136 = scmp.eq.s32.totalorder %s135, 0
      %s138 = sadd.s32 %s137, 1
      %s139 = scalar_select %p136, %s137, %s138
      %p142 = pneg %p136
      %p143 = scmp.eq.s32.totalorder %s17, 1
      %p144 = por %p142, %p143
      %p145 = scmp.ne.s32.totalorder %s137, %s140
      %p146 = scmp.eq.s32.totalorder %s17, 0
      %p147 = por %p145, %p146
      %p148 = scmp.ne.s32.totalorder %s137, %s140
      %p149 = scmp.eq.s32.totalorder %s22, 1
      %p150 = por %p148, %p149
      %p151 = scmp.ne.s32.totalorder %s140, %s141
      %p152 = scmp.eq.s32.totalorder %s22, 0
      %p153 = por %p151, %p152
      %p154 = scmp.ne.s32.totalorder %s140, %s141
      %p155 = scmp.eq.s32.totalorder %s23, 1
      %p156 = por %p154, %p155
      %p158 = scmp.ne.s32.totalorder %s141, %s157
      %p159 = scmp.eq.s32.totalorder %s23, 0
      %p160 = por %p158, %p159
      %p161 = scmp.le.s32.totalorder 1, %s17
      %p162 = scmp.lt.s32.totalorder %s17, 3
      %p163 = pnand %p161, %p162
      %p164 = pneg %p163
      // Predicated region
      $region9: #{tpu_custom_call.1} parent=5 // pred_check
        _
      $region10: #{tpu_custom_call.1} parent=5 // pred_check_branch
        %166 = sbr.rel (%p163) target = $region12
      $region11: #{tpu_custom_call.1} parent=5 // pred_region
        %s167 = ssub.s32 %s17, 1
        // Predicated region
        $region13: #{tpu_custom_call.1} parent=11 // pred_check
          %p168 = pneg %p64
        $region14: #{tpu_custom_call.1} parent=11 // pred_check_branch
          %170 = sbr.rel (%p168) target = $region16
        $region15: #{tpu_custom_call.1} parent=11 // pred_region
          _
        $region16: #{tpu_custom_call.1} parent=11 // pred_fallthru
          _
        // Predicated region
        $region17: #{tpu_custom_call.1} parent=11 // pred_check
          %p171 = pneg %p85
        $region18: #{tpu_custom_call.1} parent=11 // pred_check_branch
          %173 = sbr.rel (%p171) target = $region20
        $region19: #{tpu_custom_call.1} parent=11 // pred_region
          _
        $region20: #{tpu_custom_call.1} parent=11 // pred_fallthru
          _
        // Predicated region
        $region21: #{tpu_custom_call.1} parent=11 // pred_check
          %p174 = pneg %p106
        $region22: #{tpu_custom_call.1} parent=11 // pred_check_branch
          %176 = sbr.rel (%p174) target = $region24
        $region23: #{tpu_custom_call.1} parent=11 // pred_region
          _
        $region24: #{tpu_custom_call.1} parent=11 // pred_fallthru
          _
        // Predicated region
        $region25: #{tpu_custom_call.1} parent=11 // pred_check
          %p177 = pneg %p127
        $region26: #{tpu_custom_call.1} parent=11 // pred_check_branch
          %179 = sbr.rel (%p177) target = $region28
        $region27: #{tpu_custom_call.1} parent=11 // pred_region
          _
        $region28: #{tpu_custom_call.1} parent=11 // pred_fallthru
          _
      $region12: #{tpu_custom_call.1} parent=5 // pred_fallthru
        _
      %p180 = scmp.lt.s32.totalorder %s17, 2
      // Predicated region
      $region29: #{tpu_custom_call.1} parent=5 // pred_check
        %p181 = pneg %p180
      $region30: #{tpu_custom_call.1} parent=5 // pred_check_branch
        %183 = sbr.rel (%p181) target = $region32
      $region31: #{tpu_custom_call.1} parent=5 // pred_region
        // Predicated region
        $region33: #{tpu_custom_call.1} parent=31 // pred_check
          %p184 = pneg %p37
        $region34: #{tpu_custom_call.1} parent=31 // pred_check_branch
          %186 = sbr.rel (%p184) target = $region36
        $region35: #{tpu_custom_call.1} parent=31 // pred_region
          %s187 = sand.u32 %s27, 1
          %s188 = scalar_lea.sflag [#allocation5], %s187
          %s189 = sand.u32 %s27, 1
          %s190 = smul.addr %s189, 8
          %s191 = scalar_lea.vmem [#allocation4], %s190
          %s193 = ssub.s32 128, 128
          %194 = vsyncadd %s188, %s193
          %s195 = smul.addr %s17, 2
          %s196 = smul.addr %s195, 64
          %s197 = scalar_lea.hbm %s0, %s196
          %s199 = sshll.u32 %s191, 4
          %s200 = int_to_ptr.vmem [resolvable:$true] %s199
          %202 = dma.hbm_to_vmem [thread:$0]  %s197, 128, %s200, %s188
        $region36: #{tpu_custom_call.1} parent=31 // pred_fallthru
          _
      $region32: #{tpu_custom_call.1} parent=5 // pred_fallthru
        _
      %p203 = scmp.le.s32.totalorder 1, %s17
      %p204 = scmp.lt.s32.totalorder %s17, 3
      %p205 = pnand %p203, %p204
      %p206 = pneg %p205
      // Predicated region
      $region37: #{tpu_custom_call.1} parent=5 // pred_check
        _
      $region38: #{tpu_custom_call.1} parent=5 // pred_check_branch
        %208 = sbr.rel (%p205) target = $region40
      $region39: #{tpu_custom_call.1} parent=5 // pred_region
        %s209 = ssub.s32 %s17, 1
        %s210 = sand.u32 %s30, 1
        %s211 = scalar_lea.sflag [#allocation5], %s210
        %s212 = sand.u32 %s30, 1
        %s213 = smul.addr %s212, 8
        %s214 = scalar_lea.vmem [#allocation4], %s213
        // Predicated region
        $region41: #{tpu_custom_call.1} parent=39 // pred_check
          %p215 = pneg %p43
        $region42: #{tpu_custom_call.1} parent=39 // pred_check_branch
          %217 = sbr.rel (%p215) target = $region44
        $region43: #{tpu_custom_call.1} parent=39 // pred_region
          %218 = dma.done %s211, 128
        $region44: #{tpu_custom_call.1} parent=39 // pred_fallthru
          _
        %s219 = sand.u32 %s30, 1
        %s220 = scalar_lea.sflag [#allocation5], %s219
        %s221 = sand.u32 %s30, 1
        %s222 = smul.addr %s221, 8
        %s223 = scalar_lea.vmem [#allocation4], %s222
        %p224 = pneg %p43
        %p225 = pneg %p40
        %p226 = pneg %p64
        %p227 = pneg %p61
        %p228 = pneg %p85
        %p229 = pneg %p82
        %p230 = pneg %p106
        %p231 = pneg %p103
        %p232 = pneg %p127
        %p233 = pneg %p124
        %p234 = pneg %p153
        %p235 = pneg %p150
        %s236 = sand.u32 %s140, 1
        %s237 = scalar_lea.sflag [#allocation6], %s236
        %s238 = sand.u32 %s140, 1
        %s239 = smul.addr %s238, 8
        %s240 = scalar_lea.vmem [#allocation7], %s239
        %v242 = vlaneseq
        %v243 = vand.u32 %v242, 127
        %v244 = vadd.s32 %v243, 128
        %vm245 = vcmp.lt.s32.totalorder %v243, 0
        %v246 = vsub.s32 0, %v243
        %v247 = vsel %vm245, %v246, %v243
        %v248 = vshrl.u32 %v247, 4
        %v249 = vand.u32 %v247, 15
        %v250 = vsub.s32 0, %v249
        %v251 = vsel %vm245, %v250, %v249
        %vm252 = vcmp.lt.s32.totalorder %v244, 0
        %v253 = vsub.s32 0, %v244
        %v254 = vsel %vm252, %v253, %v244
        %v255 = vshrl.u32 %v254, 4
        %v256 = vand.u32 %v254, 15
        %v257 = vsub.s32 0, %v256
        %v258 = vsel %vm252, %v257, %v256
        %vm259 = vcmp.ne.s32.totalorder %v251, 0
        %vm260 = vcmp.ne.s32.totalorder %v258, 0
        %vm261 = vcmp.lt.s32.totalorder %v251, 0
        %vm262 = vcmp.lt.s32.totalorder %v258, 0
        %vm263 = vmand %vm261, %vm259
        %vm264 = vmand %vm262, %vm260
        %v265 = vadd.s32 %v251, 16
        %v266 = vadd.s32 %v258, 16
        %v267 = vsel %vm263, %v265, %v251
        %v268 = vsel %vm264, %v266, %v258
        %vm269 = vcmp.ge.s32.totalorder %v267, 1
        %vm270 = vcmp.ge.s32.totalorder %v268, 1
        %vm271 = vcmp.le.s32.totalorder %v267, 14
        %vm272 = vcmp.le.s32.totalorder %v268, 14
        %273 = vst [vmem:[#allocation2] sm:$0xf] 0.0
        %274 = vst [vmem:[#allocation2 + $0xc] sm:$0xf] 0.0
        %v275 = vld [vmem:[%s214] sm:$0xff]
        %276 = vst [vmem:[#allocation2 + $0x4] sm:$0xff] %v275
        %v277 = vld [vmem:[#allocation2] sm:$0xff]
        %v278 = vld [vmem:[#allocation2 + $0x8] sm:$0xf]
        %v279 = vsel %vm269, 1, 0
        %v280 = vsel %vm270, 1, 0
        %vm281 = vcmp.eq.s32.totalorder %v279, 1
        %vm282 = vcmp.eq.s32.totalorder %v280, 1
        %v285 = vcombine.high %v277, %v277
        %286 = vrot.lane.b32.xlu0 %v277, 17
        %v287 = vpop.permute.xlu0 %286
        %288 = vrot.lane.b32.xlu0 %v285, 17
        %v289 = vpop.permute.xlu0 %288
        %290 = vrot.lane.b32.xlu0 %v278, 17
        %v291 = vpop.permute.xlu0 %290
        %vm292 = vcmask 138240
        %v293 = vsel %vm292, %v287, %v289
        %v294 = vsel %vm292, %v289, %v291
        %v297 = vsel %vm281, %v293, 0.0
        %v298 = vsel %vm282, %v294, 0.0
        %299 = vst [vmem:[#allocation3] sm:$0xf] %v297
        %300 = vst [vmem:[#allocation3 + $0x8] sm:$0xf] %v298
        %v301 = vld [vmem:[#allocation2] sm:$0xff]
        %v302 = vld [vmem:[#allocation2 + $0x8] sm:$0xf]
        %v305 = vcombine.low %v301, %v301
        %v306 = vcombine.low %v302, %v302
        %307 = vrot.lane.b32.xlu0 %v305, 16
        %v308 = vpop.permute.xlu0 %307
        %309 = vrot.lane.b32.xlu0 %v301, 16
        %v310 = vpop.permute.xlu0 %309
        %311 = vrot.lane.b32.xlu0 %v306, 16
        %v312 = vpop.permute.xlu0 %311
        %vm313 = vcmask 130048
        %v314 = vsel %vm313, %v308, %v310
        %v315 = vsel %vm313, %v310, %v312
        %318 = vst [vmem:[#allocation3] sm:$0xf0] %v314
        %319 = vst [vmem:[#allocation3 + $0x8] sm:$0xf0] %v315
        %v320 = vld [vmem:[#allocation2] sm:$0xff]
        %v321 = vld [vmem:[#allocation2 + $0x8] sm:$0xf]
        %v322 = vsel %vm271, 1, 0
        %v323 = vsel %vm272, 1, 0
        %vm324 = vcmp.eq.s32.totalorder %v322, 1
        %vm325 = vcmp.eq.s32.totalorder %v323, 1
        %v328 = vcombine.high %v320, %v320
        %329 = vrot.lane.b32.xlu0 %v320, 15
        %v330 = vpop.permute.xlu0 %329
        %331 = vrot.lane.b32.xlu0 %v328, 15
        %v332 = vpop.permute.xlu0 %331
        %333 = vrot.lane.b32.xlu0 %v321, 15
        %v334 = vpop.permute.xlu0 %333
        %vm335 = vcmask 121856
        %v336 = vsel %vm335, %v330, %v332
        %v337 = vsel %vm335, %v332, %v334
        %v340 = vsel %vm324, %v336, 0.0
        %v341 = vsel %vm325, %v337, 0.0
        %342 = vst [vmem:[#allocation3 + $0x10] sm:$0xf] %v340
        %343 = vst [vmem:[#allocation3 + $0x18] sm:$0xf] %v341
        %v344 = vld [vmem:[#allocation2] sm:$0xff]
        %v345 = vld [vmem:[#allocation2 + $0x8] sm:$0xf]
        %v348 = vcombine.high %v344, %v344
        %349 = vrot.lane.b32.xlu0 %v344, 1
        %v350 = vpop.permute.xlu0 %349
        %351 = vrot.lane.b32.xlu0 %v348, 1
        %v352 = vpop.permute.xlu0 %351
        %353 = vrot.lane.b32.xlu0 %v345, 1
        %v354 = vpop.permute.xlu0 %353
        %vm355 = vcmask 7168
        %v356 = vsel %vm355, %v350, %v352
        %v357 = vsel %vm355, %v352, %v354
        %v360 = vsel %vm281, %v356, 0.0
        %v361 = vsel %vm282, %v357, 0.0
        %v364 = vrot.slane %v360, 4
        %v365 = vrot.slane %v361, 4
        %368 = vst [vmem:[#allocation3 + $0x10] sm:$0xf0] %v364
        %369 = vst [vmem:[#allocation3 + $0x18] sm:$0xf0] %v365
        %v370 = vld [vmem:[#allocation2 + $0x4] sm:$0xff]
        %v372 = vcombine.high %v370, %v370
        %374 = vst [vmem:[#allocation3 + $0x20] sm:$0xf] %v370
        %375 = vst [vmem:[#allocation3 + $0x28] sm:$0xf] %v372
        %v376 = vld [vmem:[#allocation2 + $0x4] sm:$0xff]
        %v377 = vld [vmem:[#allocation2 + $0xc] sm:$0xf]
        %v380 = vcombine.high %v376, %v376
        %381 = vrot.lane.b32.xlu0 %v376, 127
        %v382 = vpop.permute.xlu0 %381
        %383 = vrot.lane.b32.xlu0 %v380, 127
        %v384 = vpop.permute.xlu0 %383
        %385 = vrot.lane.b32.xlu0 %v377, 127
        %v386 = vpop.permute.xlu0 %385
        %vm387 = vcmask 1039360
        %v388 = vsel %vm387, %v382, %v384
        %v389 = vsel %vm387, %v384, %v386
        %v392 = vsel %vm324, %v388, 0.0
        %v393 = vsel %vm325, %v389, 0.0
        %v396 = vrot.slane %v392, 4
        %v397 = vrot.slane %v393, 4
        %400 = vst [vmem:[#allocation3 + $0x20] sm:$0xf0] %v396
        %401 = vst [vmem:[#allocation3 + $0x28] sm:$0xf0] %v397
        %v402 = vld [vmem:[#allocation2 + $0x4] sm:$0xff]
        %v403 = vld [vmem:[#allocation2 + $0xc] sm:$0xf]
        %v406 = vcombine.high %v402, %v402
        %407 = vrot.lane.b32.xlu0 %v402, 113
        %v408 = vpop.permute.xlu0 %407
        %409 = vrot.lane.b32.xlu0 %v406, 113
        %v410 = vpop.permute.xlu0 %409
        %411 = vrot.lane.b32.xlu0 %v403, 113
        %v412 = vpop.permute.xlu0 %411
        %vm413 = vcmask 924672
        %v414 = vsel %vm413, %v408, %v410
        %v415 = vsel %vm413, %v410, %v412
        %v418 = vsel %vm281, %v414, 0.0
        %v419 = vsel %vm282, %v415, 0.0
        %420 = vst [vmem:[#allocation3 + $0x30] sm:$0xf] %v418
        %421 = vst [vmem:[#allocation3 + $0x38] sm:$0xf] %v419
        %v422 = vld [vmem:[#allocation2 + $0x4] sm:$0xff]
        %v423 = vld [vmem:[#allocation2 + $0xc] sm:$0xf]
        %v426 = vcombine.low %v422, %v422
        %v427 = vcombine.low %v423, %v423
        %428 = vrot.lane.b32.xlu0 %v426, 112
        %v429 = vpop.permute.xlu0 %428
        %430 = vrot.lane.b32.xlu0 %v422, 112
        %v431 = vpop.permute.xlu0 %430
        %432 = vrot.lane.b32.xlu0 %v427, 112
        %v433 = vpop.permute.xlu0 %432
        %vm434 = vcmask 916480
        %v435 = vsel %vm434, %v429, %v431
        %v436 = vsel %vm434, %v431, %v433
        %439 = vst [vmem:[#allocation3 + $0x30] sm:$0xf0] %v435
        %440 = vst [vmem:[#allocation3 + $0x38] sm:$0xf0] %v436
        %v441 = vld [vmem:[#allocation2 + $0x4] sm:$0xff]
        %v442 = vld [vmem:[#allocation2 + $0xc] sm:$0xf]
        %v445 = vcombine.high %v441, %v441
        %446 = vrot.lane.b32.xlu0 %v441, 111
        %v447 = vpop.permute.xlu0 %446
        %448 = vrot.lane.b32.xlu0 %v445, 111
        %v449 = vpop.permute.xlu0 %448
        %450 = vrot.lane.b32.xlu0 %v442, 111
        %v451 = vpop.permute.xlu0 %450
        %vm452 = vcmask 908288
        %v453 = vsel %vm452, %v447, %v449
        %v454 = vsel %vm452, %v449, %v451
        %v457 = vsel %vm324, %v453, 0.0
        %v458 = vsel %vm325, %v454, 0.0
        %459 = vst [vmem:[#allocation3 + $0x40] sm:$0xf] %v457
        %460 = vst [vmem:[#allocation3 + $0x48] sm:$0xf] %v458
        %v461 = vld [vmem:[%s1] sm:$0x3]
        %v462 = vld [vmem:[#allocation3] sm:$0xff]
        %v463 = vld [vmem:[#allocation3 + $0x8] sm:$0xff]
        %v464 = vld [vmem:[#allocation3 + $0x10] sm:$0xff]
        %v465 = vld [vmem:[#allocation3 + $0x18] sm:$0xff]
        %v466 = vld [vmem:[#allocation3 + $0x20] sm:$0xff]
        %v467 = vld [vmem:[#allocation3 + $0x28] sm:$0xff]
        %v468 = vld [vmem:[#allocation3 + $0x30] sm:$0xff]
        %v469 = vld [vmem:[#allocation3 + $0x38] sm:$0xff]
        %v470 = vld [vmem:[#allocation3 + $0x40] sm:$0xf]
        %v471 = vld [vmem:[#allocation3 + $0x48] sm:$0xf]
        %v472 = vpack.c.bf16 %v464, %v462
        %v473 = vpack.c.bf16 %v465, %v463
        %v474 = vpack.c.bf16 %v468, %v466
        %v475 = vpack.c.bf16 %v469, %v467
        %v476 = vpack.c.bf16 %v470, %v470
        %v477 = vpack.c.bf16 %v471, %v471
        %v478 = vld [vmem:[%s2] sm:$0xf]
        %480 = vset.pattern.permute.xlu0 0
        %481 = vperm.xlu0 %480, %v478
        %v482 = vpop.permute.xlu0 %481
        %vm484 = vcmask 293888
        %v486 = vsel %vm484, %v461, 0
        %vm488 = vcmask 1041408
        %v490 = vsel %vm488, %v476, 0
        %v493 = vsel %vm488, %v477, 0
        %495 = vmatprep.subr.bf16.mxu0 0
        %496 = vmatpush1.bf16.msra.mxu0 0
        %497 = vmatprep.subr.bf16.mxu0 0
        %498 = vmatpush1.bf16.msra.mxu0 0
        %499 = vmatprep.subr.bf16.mxu0 0
        %500 = vmatpush1.bf16.msra.mxu0 0
        %501 = vmatprep.subr.bf16.mxu0 0
        %502 = vmatpush1.bf16.msra.mxu0 0
        %503 = vmatprep.subr.bf16.mxu0 0
        %504 = vmatpush1.bf16.msra.mxu0 0
        %505 = vmatprep.subr.bf16.mxu0 %v493
        %506 = vmatpush1.bf16.msra.mxu0 %v490
        %507 = vmatprep.subr.bf16.mxu0 %v475
        %508 = vmatpush1.bf16.msra.mxu0 %v474
        %509 = vmatprep.subr.bf16.mxu0 %v473
        %510 = vmatpush1.bf16.msra.mxu0 %v472
        %511 = vmatprep.subr.bf16.mxu0 0
        %512 = vmatpush2.bf16.msra.mxu0 0
        %513 = vmatprep.subr.bf16.mxu0 0
        %514 = vmatpush2.bf16.msra.mxu0 0
        %515 = vmatprep.subr.bf16.mxu0 0
        %516 = vmatpush2.bf16.msra.mxu0 0
        %517 = vmatprep.subr.bf16.mxu0 0
        %518 = vmatpush2.bf16.msra.mxu0 0
        %519 = vmatprep.subr.bf16.mxu0 0
        %520 = vmatpush2.bf16.msra.mxu0 0
        %521 = vmatprep.subr.bf16.mxu0 0
        %522 = vmatpush2.bf16.msra.mxu0 0
        %523 = vmatprep.subr.bf16.mxu0 0
        %524 = vmatpush2.bf16.msra.mxu0 0
        %525 = vmatprep.subr.bf16.mxu0 0
        %526 = vmatpush2.bf16.msra.mxu0 0
        %527 = vmatprep.mubr.bf16.mxu0 0
        %528 = vmatmul.mubr.bf16.gmra.mxu0 %v486
        %v529 = vpop.f32.mrf.mxu0
        %v530 = vadd.f32 %v482, %v529
        %v531 = vpop.f32.mrf.mxu0
        %v532 = vadd.f32 %v482, %v531
        %v533 = vpop.f32.mrf.mxu0
        %v534 = vpop.f32.mrf.mxu0
        %535 = vdwg.mxu0
        %v536 = vmax.f32 %v530, 0.0
        %v537 = vmax.f32 %v532, 0.0
        %v540 = vcombine.low %v536, %v537
        %542 = vst [vmem:[#allocation2 + $0x4] sm:$0xff] %v540
        %v543 = vld [vmem:[#allocation2] sm:$0xff]
        %v544 = vld [vmem:[#allocation2 + $0x8] sm:$0xf]
        %v547 = vcombine.high %v543, %v543
        %548 = vrot.lane.b32.xlu0 %v543, 17
        %v549 = vpop.permute.xlu0 %548
        %550 = vrot.lane.b32.xlu0 %v547, 17
        %v551 = vpop.permute.xlu0 %550
        %552 = vrot.lane.b32.xlu0 %v544, 17
        %v553 = vpop.permute.xlu0 %552
        %v554 = vsel %vm292, %v549, %v551
        %v555 = vsel %vm292, %v551, %v553
        %v558 = vsel %vm281, %v554, 0.0
        %v559 = vsel %vm282, %v555, 0.0
        %560 = vst [vmem:[#allocation3] sm:$0xf] %v558
        %561 = vst [vmem:[#allocation3 + $0x8] sm:$0xf] %v559
        %v562 = vld [vmem:[#allocation2] sm:$0xff]
        %v563 = vld [vmem:[#allocation2 + $0x8] sm:$0xf]
        %v566 = vcombine.low %v562, %v562
        %v567 = vcombine.low %v563, %v563
        %568 = vrot.lane.b32.xlu0 %v566, 16
        %v569 = vpop.permute.xlu0 %568
        %570 = vrot.lane.b32.xlu0 %v562, 16
        %v571 = vpop.permute.xlu0 %570
        %572 = vrot.lane.b32.xlu0 %v567, 16
        %v573 = vpop.permute.xlu0 %572
        %v574 = vsel %vm313, %v569, %v571
        %v575 = vsel %vm313, %v571, %v573
        %578 = vst [vmem:[#allocation3] sm:$0xf0] %v574
        %579 = vst [vmem:[#allocation3 + $0x8] sm:$0xf0] %v575
        %v580 = vld [vmem:[#allocation2] sm:$0xff]
        %v581 = vld [vmem:[#allocation2 + $0x8] sm:$0xf]
        %v584 = vcombine.high %v580, %v580
        %585 = vrot.lane.b32.xlu0 %v580, 15
        %v586 = vpop.permute.xlu0 %585
        %587 = vrot.lane.b32.xlu0 %v584, 15
        %v588 = vpop.permute.xlu0 %587
        %589 = vrot.lane.b32.xlu0 %v581, 15
        %v590 = vpop.permute.xlu0 %589
        %v591 = vsel %vm335, %v586, %v588
        %v592 = vsel %vm335, %v588, %v590
        %v595 = vsel %vm324, %v591, 0.0
        %v596 = vsel %vm325, %v592, 0.0
        %597 = vst [vmem:[#allocation3 + $0x10] sm:$0xf] %v595
        %598 = vst [vmem:[#allocation3 + $0x18] sm:$0xf] %v596
        %v599 = vld [vmem:[#allocation2] sm:$0xff]
        %v600 = vld [vmem:[#allocation2 + $0x8] sm:$0xf]
        %v603 = vcombine.high %v599, %v599
        %604 = vrot.lane.b32.xlu0 %v599, 1
        %v605 = vpop.permute.xlu0 %604
        %606 = vrot.lane.b32.xlu0 %v603, 1
        %v607 = vpop.permute.xlu0 %606
        %608 = vrot.lane.b32.xlu0 %v600, 1
        %v609 = vpop.permute.xlu0 %608
        %v610 = vsel %vm355, %v605, %v607
        %v611 = vsel %vm355, %v607, %v609
        %v614 = vsel %vm281, %v610, 0.0
        %v615 = vsel %vm282, %v611, 0.0
        %v618 = vrot.slane %v614, 4
        %v619 = vrot.slane %v615, 4
        %622 = vst [vmem:[#allocation3 + $0x10] sm:$0xf0] %v618
        %623 = vst [vmem:[#allocation3 + $0x18] sm:$0xf0] %v619
        %v624 = vld [vmem:[#allocation2 + $0x4] sm:$0xff]
        %v626 = vcombine.high %v624, %v624
        %628 = vst [vmem:[#allocation3 + $0x20] sm:$0xf] %v624
        %629 = vst [vmem:[#allocation3 + $0x28] sm:$0xf] %v626
        %v630 = vld [vmem:[#allocation2 + $0x4] sm:$0xff]
        %v631 = vld [vmem:[#allocation2 + $0xc] sm:$0xf]
        %v634 = vcombine.high %v630, %v630
        %635 = vrot.lane.b32.xlu0 %v630, 127
        %v636 = vpop.permute.xlu0 %635
        %637 = vrot.lane.b32.xlu0 %v634, 127
        %v638 = vpop.permute.xlu0 %637
        %639 = vrot.lane.b32.xlu0 %v631, 127
        %v640 = vpop.permute.xlu0 %639
        %v641 = vsel %vm387, %v636, %v638
        %v642 = vsel %vm387, %v638, %v640
        %v645 = vsel %vm324, %v641, 0.0
        %v646 = vsel %vm325, %v642, 0.0
        %v649 = vrot.slane %v645, 4
        %v650 = vrot.slane %v646, 4
        %653 = vst [vmem:[#allocation3 + $0x20] sm:$0xf0] %v649
        %654 = vst [vmem:[#allocation3 + $0x28] sm:$0xf0] %v650
        %v655 = vld [vmem:[#allocation2 + $0x4] sm:$0xff]
        %v656 = vld [vmem:[#allocation2 + $0xc] sm:$0xf]
        %v659 = vcombine.high %v655, %v655
        %660 = vrot.lane.b32.xlu0 %v655, 113
        %v661 = vpop.permute.xlu0 %660
        %662 = vrot.lane.b32.xlu0 %v659, 113
        %v663 = vpop.permute.xlu0 %662
        %664 = vrot.lane.b32.xlu0 %v656, 113
        %v665 = vpop.permute.xlu0 %664
        %v666 = vsel %vm413, %v661, %v663
        %v667 = vsel %vm413, %v663, %v665
        %v670 = vsel %vm281, %v666, 0.0
        %v671 = vsel %vm282, %v667, 0.0
        %672 = vst [vmem:[#allocation3 + $0x30] sm:$0xf] %v670
        %673 = vst [vmem:[#allocation3 + $0x38] sm:$0xf] %v671
        %v674 = vld [vmem:[#allocation2 + $0x4] sm:$0xff]
        %v675 = vld [vmem:[#allocation2 + $0xc] sm:$0xf]
        %v678 = vcombine.low %v674, %v674
        %v679 = vcombine.low %v675, %v675
        %680 = vrot.lane.b32.xlu0 %v678, 112
        %v681 = vpop.permute.xlu0 %680
        %682 = vrot.lane.b32.xlu0 %v674, 112
        %v683 = vpop.permute.xlu0 %682
        %684 = vrot.lane.b32.xlu0 %v679, 112
        %v685 = vpop.permute.xlu0 %684
        %v686 = vsel %vm434, %v681, %v683
        %v687 = vsel %vm434, %v683, %v685
        %690 = vst [vmem:[#allocation3 + $0x30] sm:$0xf0] %v686
        %691 = vst [vmem:[#allocation3 + $0x38] sm:$0xf0] %v687
        %v692 = vld [vmem:[#allocation2 + $0x4] sm:$0xff]
        %v693 = vld [vmem:[#allocation2 + $0xc] sm:$0xf]
        %v696 = vcombine.high %v692, %v692
        %697 = vrot.lane.b32.xlu0 %v692, 111
        %v698 = vpop.permute.xlu0 %697
        %699 = vrot.lane.b32.xlu0 %v696, 111
        %v700 = vpop.permute.xlu0 %699
        %701 = vrot.lane.b32.xlu0 %v693, 111
        %v702 = vpop.permute.xlu0 %701
        %v703 = vsel %vm452, %v698, %v700
        %v704 = vsel %vm452, %v700, %v702
        %v707 = vsel %vm324, %v703, 0.0
        %v708 = vsel %vm325, %v704, 0.0
        %709 = vst [vmem:[#allocation3 + $0x40] sm:$0xf] %v707
        %710 = vst [vmem:[#allocation3 + $0x48] sm:$0xf] %v708
        %v711 = vld [vmem:[%s3] sm:$0x3]
        %v712 = vld [vmem:[#allocation3] sm:$0xff]
        %v713 = vld [vmem:[#allocation3 + $0x8] sm:$0xff]
        %v714 = vld [vmem:[#allocation3 + $0x10] sm:$0xff]
        %v715 = vld [vmem:[#allocation3 + $0x18] sm:$0xff]
        %v716 = vld [vmem:[#allocation3 + $0x20] sm:$0xff]
        %v717 = vld [vmem:[#allocation3 + $0x28] sm:$0xff]
        %v718 = vld [vmem:[#allocation3 + $0x30] sm:$0xff]
        %v719 = vld [vmem:[#allocation3 + $0x38] sm:$0xff]
        %v720 = vld [vmem:[#allocation3 + $0x40] sm:$0xf]
        %v721 = vld [vmem:[#allocation3 + $0x48] sm:$0xf]
        %v722 = vpack.c.bf16 %v714, %v712
        %v723 = vpack.c.bf16 %v715, %v713
        %v724 = vpack.c.bf16 %v718, %v716
        %v725 = vpack.c.bf16 %v719, %v717
        %v726 = vpack.c.bf16 %v720, %v720
        %v727 = vpack.c.bf16 %v721, %v721
        %v728 = vld [vmem:[%s4] sm:$0xf]
        %730 = vset.pattern.permute.xlu0 0
        %731 = vperm.xlu0 %730, %v728
        %v732 = vpop.permute.xlu0 %731
        %v735 = vsel %vm484, %v711, 0
        %v738 = vsel %vm488, %v726, 0
        %v741 = vsel %vm488, %v727, 0
        %743 = vmatprep.subr.bf16.mxu0 0
        %744 = vmatpush1.bf16.msra.mxu0 0
        %745 = vmatprep.subr.bf16.mxu0 0
        %746 = vmatpush1.bf16.msra.mxu0 0
        %747 = vmatprep.subr.bf16.mxu0 0
        %748 = vmatpush1.bf16.msra.mxu0 0
        %749 = vmatprep.subr.bf16.mxu0 0
        %750 = vmatpush1.bf16.msra.mxu0 0
        %751 = vmatprep.subr.bf16.mxu0 0
        %752 = vmatpush1.bf16.msra.mxu0 0
        %753 = vmatprep.subr.bf16.mxu0 %v741
        %754 = vmatpush1.bf16.msra.mxu0 %v738
        %755 = vmatprep.subr.bf16.mxu0 %v725
        %756 = vmatpush1.bf16.msra.mxu0 %v724
        %757 = vmatprep.subr.bf16.mxu0 %v723
        %758 = vmatpush1.bf16.msra.mxu0 %v722
        %759 = vmatprep.subr.bf16.mxu0 0
        %760 = vmatpush2.bf16.msra.mxu0 0
        %761 = vmatprep.subr.bf16.mxu0 0
        %762 = vmatpush2.bf16.msra.mxu0 0
        %763 = vmatprep.subr.bf16.mxu0 0
        %764 = vmatpush2.bf16.msra.mxu0 0
        %765 = vmatprep.subr.bf16.mxu0 0
        %766 = vmatpush2.bf16.msra.mxu0 0
        %767 = vmatprep.subr.bf16.mxu0 0
        %768 = vmatpush2.bf16.msra.mxu0 0
        %769 = vmatprep.subr.bf16.mxu0 0
        %770 = vmatpush2.bf16.msra.mxu0 0
        %771 = vmatprep.subr.bf16.mxu0 0
        %772 = vmatpush2.bf16.msra.mxu0 0
        %773 = vmatprep.subr.bf16.mxu0 0
        %774 = vmatpush2.bf16.msra.mxu0 0
        %775 = vmatprep.mubr.bf16.mxu0 0
        %776 = vmatmul.mubr.bf16.gmra.mxu0 %v735
        %v777 = vpop.f32.mrf.mxu0
        %v778 = vadd.f32 %v732, %v777
        %v779 = vpop.f32.mrf.mxu0
        %v780 = vadd.f32 %v732, %v779
        %v781 = vpop.f32.mrf.mxu0
        %v782 = vpop.f32.mrf.mxu0
        %783 = vdwg.mxu0
        %v784 = vmax.f32 %v778, 0.0
        %v785 = vmax.f32 %v780, 0.0
        %v788 = vcombine.low %v784, %v785
        %v790 = vadd.f32 %v275, %v788
        %791 = vst [vmem:[%s240] sm:$0xff] %v790
        %s792 = sand.u32 %s140, 1
        %s793 = scalar_lea.sflag [#allocation6], %s792
        %s794 = sand.u32 %s140, 1
        %s795 = smul.addr %s794, 8
        %s796 = scalar_lea.vmem [#allocation7], %s795
        // Predicated region
        $region45: #{tpu_custom_call.1} parent=39 // pred_check
          %p797 = pneg %p150
        $region46: #{tpu_custom_call.1} parent=39 // pred_check_branch
          %799 = sbr.rel (%p797) target = $region48
        $region47: #{tpu_custom_call.1} parent=39 // pred_region
          %s801 = ssub.s32 128, 128
          %802 = vsyncadd %s793, %s801
          %s803 = smul.addr %s22, 2
          %s804 = smul.addr %s803, 64
          %s805 = scalar_lea.hbm %s5, %s804
          %s807 = sshll.u32 %s796, 4
          %s808 = int_to_ptr.vmem [resolvable:$true] %s807
          %810 = dma.vmem_to_hbm [thread:$0]  %s808, 128, %s805, %s793
        $region48: #{tpu_custom_call.1} parent=39 // pred_fallthru
          _
      $region40: #{tpu_custom_call.1} parent=5 // pred_fallthru
        _
      %p811 = scmp.le.s32.totalorder 2, %s17
      // Predicated region
      $region49: #{tpu_custom_call.1} parent=5 // pred_check
        %p812 = pneg %p811
      $region50: #{tpu_custom_call.1} parent=5 // pred_check_branch
        %814 = sbr.rel (%p812) target = $region52
      $region51: #{tpu_custom_call.1} parent=5 // pred_region
        %s815 = ssub.s32 %s17, 2
        // Predicated region
        $region53: #{tpu_custom_call.1} parent=51 // pred_check
          %p816 = pneg %p156
        $region54: #{tpu_custom_call.1} parent=51 // pred_check_branch
          %818 = sbr.rel (%p816) target = $region56
        $region55: #{tpu_custom_call.1} parent=51 // pred_region
          %s819 = sand.u32 %s141, 1
          %s820 = scalar_lea.sflag [#allocation6], %s819
          %s821 = sand.u32 %s141, 1
          %s822 = smul.addr %s821, 8
          %s823 = scalar_lea.vmem [#allocation7], %s822
          %824 = dma.done %s820, 128
        $region56: #{tpu_custom_call.1} parent=51 // pred_fallthru
          _
      $region52: #{tpu_custom_call.1} parent=5 // pred_fallthru
        _
    $region6: #{tpu_custom_call.1} parent=1 // loop_footer
      %s21 = sadd.s32 1, %s17
    $region7: #{tpu_custom_call.1} parent=1 // loop_footer_branch
      %16 = sbr.rel target = $region3
    $region8: #{tpu_custom_call.1} parent=1 // loop_exit
      _
    %825 = vsyncpa [#allocation5], 1
    %s826 = scalar_lea.sflag [#allocation5], 1
    %827 = vsyncpa %s826, 1
    %828 = vsyncpa [#allocation6], 1
    %s829 = scalar_lea.sflag [#allocation6], 1
    %830 = vsyncpa %s829, 1

</llo_original>
